<compile_context>
chip_gen: v6e
topology: v6e:2x2x1
jax: 0.10.0
libtpu: 0.0.40
codegen_flags: <defaults>
</compile_context>

<pallas_src>
import functools

import jax
import jax.numpy as jnp
from jax.experimental import pallas as pl
from jax.experimental.pallas import tpu as pltpu

LN_EPS = 1e-5  # PyTorch nn.LayerNorm default


def _round_up(a, b):
    return (a + b - 1) // b * b


def _vmem_capacity_bytes():
    """Physical VMEM of the current TPU generation (fallback: v7x's 64 MiB)."""
    try:
        return int(pltpu.get_tpu_info().vmem_capacity_bytes)
    except Exception:
        return 64 << 20


def _tile_plan(NH, Wc, C, x_dtype, mm_dtype, tm_tokens):
    """Pick the half-row tile `tr` (each half-row = Wc merged tokens) and the
    scoped-VMEM limit.  All quantities are Python ints (trace-time)."""
    x_sz = jnp.dtype(x_dtype).itemsize
    mm_sz = jnp.dtype(mm_dtype).itemsize
    C2 = 2 * C

    vmem_cap = _vmem_capacity_bytes()
    # ~3/4 of physical VMEM: 48 MiB on v7x, 96 MiB on v5e/v6e; never below
    # 32 MiB (v5e's scoped default is only 16 MiB).
    vmem_limit = max(32 << 20, (3 * vmem_cap) // 4)

    # Bytes that scale with the half-row tile:
    #   input block (2, Wc, 2C) x 2 pipeline buffers   -> 4 * Wc*2C * x_sz
    #   output block (Wc, 2C)   x 2 pipeline buffers   -> 2 * Wc*2C * x_sz
    #   ~3 f32 (Wc, 2C)-sized body temporaries (squares for the one-pass
    #   stats + the f32 matmul accumulator)
    per_row = Wc * C2 * (6 * x_sz + 3 * 4)
    # Tile-independent residents: two folded weights (single-buffered via
    # pl.Buffered(1)) plus the tiny colsum / bias vectors.
    fixed = 2 * C2 * C2 * mm_sz + 4 * C2 * 4

    budget = max(vmem_limit - fixed - (4 << 20), 8 * per_row)
    align = 16 if x_sz < 4 else 8          # bf16 packs 2 rows per sublane
    tr = min(budget // per_row,
             _round_up(pl.cdiv(max(tm_tokens, 1), Wc), align))
    tr = max(align, (tr // align) * align)
    # Keep >= 2 (ideally >= 8) grid steps so the two TensorCores (v7x) get
    # sharded work and the double-buffered pipeline can hide DMA latency.
    if NH >= 2 * align:
        steps = min(8, NH // align)
        tr = min(tr, max(align, _round_up(pl.cdiv(NH, steps), align)))
    return min(tr, NH), int(vmem_limit)


def _patch_merge_kernel(x_ref, w_even_ref, w_odd_ref, csum_ref, bias_ref, o_ref):
    """Fused 2x2 merge + LayerNorm(4C) + Linear(4C->2C, no bias).

    x_ref:      (tr, 2, W/2, 2C)  tr half-row pairs straight from x (no slab)
    w_even_ref: (2C, 2C_out)      gamma-folded W^T rows [0:C] ++ [2C:3C]
    w_odd_ref:  (2C, 2C_out)      gamma-folded W^T rows [C:2C] ++ [3C:4C]
    csum_ref:   (1, 2C_out)       column sums of the gamma-folded weight (f32)
    bias_ref:   (1, 2C_out)       beta @ W^T (f32)
    o_ref:      (tr * W/2, 2C_out)
    """
    tr, _, wc, c2 = x_ref.shape
    r = tr * wc  # merged tokens in this tile

    # Even / odd image-row planes; collapse (tr, Wc) -> token rows (lane dim
    # unchanged, so the reshape is a cheap leading-dim collapse).
    xe = x_ref[:, 0, :, :].reshape(r, c2)   # [x0 | x2] channels
    xo = x_ref[:, 1, :, :].reshape(r, c2)   # [x1 | x3] channels

    # One-pass LayerNorm statistics over the full 4C features, in f32.
    xe32 = xe.astype(jnp.float32)
    xo32 = xo.astype(jnp.float32)
    ssum = jnp.sum(xe32, -1, keepdims=True) + jnp.sum(xo32, -1, keepdims=True)
    ssq = (jnp.sum(xe32 * xe32, -1, keepdims=True)
           + jnp.sum(xo32 * xo32, -1, keepdims=True))
    inv_n = 1.0 / (2 * c2)                              # 1 / (4C)
    mean = ssum * inv_n
    var = jnp.maximum(ssq * inv_n - mean * mean, 0.0)   # biased, as in PyTorch
    rstd = jax.lax.rsqrt(var + LN_EPS)

    # Raw-x matmuls on the MXU (bf16 fast path when x is bf16), f32 accumulate.
    mm = w_even_ref.dtype
    acc = jnp.dot(xe.astype(mm), w_even_ref[...],
                  preferred_element_type=jnp.float32)
    acc = acc + jnp.dot(xo.astype(mm), w_odd_ref[...],
                        preferred_element_type=jnp.float32)

    # Normalization + LN affine applied after the matmul (exact algebra):
    #   out = rstd * (x @ (gamma*W^T) - mean * colsum(gamma*W^T)) + beta @ W^T
    out = rstd * (acc - mean * csum_ref[...]) + bias_ref[...]
    o_ref[...] = out.astype(o_ref.dtype)


@functools.partial(jax.jit, static_argnames=("H", "W", "tm"))
def patch_merging(x, gamma, beta, w, *, H, W, tm=2048):
    """x: (B, H*W, C) -> (B, (H/2)*(W/2), 2C).

    gamma, beta: (4C,) LayerNorm params.  w: (2C, 4C) nn.Linear weight (no bias).
    `tm` is the target number of merged tokens per tile.
    """
    B, L, C = x.shape
    assert L == H * W, "input feature has wrong size"
    assert H % 2 == 0 and W % 2 == 0, f"x size ({H}*{W}) are not even."
    NH, Wc = B * (H // 2), W // 2
    C2, C2o = 2 * C, 2 * C
    N = NH * Wc

    # Free, bit-preserving reshape — no (N, 4C) gather slab in HBM.
    xr = x.reshape(NH, 2, Wc, C2)

    # Fold the LN affine into the reduction weight (once, outside the hot loop)
    # and split / permute its rows per h-parity plane.
    mm_dtype = jnp.bfloat16 if x.dtype == jnp.bfloat16 else jnp.float32
    w_t = w.astype(jnp.float32).T                                 # (4C, 2C_out)
    w_fold = gamma.astype(jnp.float32)[:, None] * w_t             # gamma * W^T
    w_even = jnp.concatenate([w_fold[0:C], w_fold[2 * C:3 * C]], 0).astype(mm_dtype)
    w_odd = jnp.concatenate([w_fold[C:2 * C], w_fold[3 * C:4 * C]], 0).astype(mm_dtype)
    csum = jnp.sum(w_fold, axis=0).reshape(1, C2o)                # f32
    bias = (beta.astype(jnp.float32) @ w_t).reshape(1, C2o)       # f32

    tr, vmem_limit = _tile_plan(NH, Wc, C, x.dtype, mm_dtype, tm)
    grid = (pl.cdiv(NH, tr),)   # ragged NH handled by Pallas masking (no pad)

    # Note: for tiny C (2C < 128 lanes, e.g. dim=4) the output stores are
    # lane-masked and far from roofline; Swin-scale dims (C >= 64) are lane
    # dense.  The Pallas path is kept for all sizes so it is always exercised.
    out = pl.pallas_call(
        _patch_merge_kernel,
        out_shape=jax.ShapeDtypeStruct((N, C2o), x.dtype),
        grid_spec=pltpu.PrefetchScalarGridSpec(
            num_scalar_prefetch=0,
            grid=grid,
            in_specs=[
                # token half-rows straight from x: one contiguous DMA per tile
                pl.BlockSpec((tr, 2, Wc, C2), lambda i: (i, 0, 0, 0)),
                # constant-index weights: never re-fetched -> single buffer
                pl.BlockSpec((C2, C2o), lambda i: (0, 0),
                             pipeline_mode=pl.Buffered(1)),
                pl.BlockSpec((C2, C2o), lambda i: (0, 0),
                             pipeline_mode=pl.Buffered(1)),
                pl.BlockSpec((1, C2o), lambda i: (0, 0)),
                pl.BlockSpec((1, C2o), lambda i: (0, 0)),
            ],
            out_specs=pl.BlockSpec((tr * Wc, C2o), lambda i: (i, 0)),
        ),
        compiler_params=pltpu.CompilerParams(
            dimension_semantics=("parallel",),   # shard row tiles across TCs
            vmem_limit_bytes=vmem_limit,
        ),
    )(xr, w_even, w_odd, csum, bias)

    return out.reshape(B, (H // 2) * (W // 2), C2o)


def _reference(x, gamma, beta, w, H, W):
    B, L, C = x.shape
    xg = x.reshape(B, H, W, C)
    x0 = xg[:, 0::2, 0::2, :]
    x1 = xg[:, 1::2, 0::2, :]
    x2 = xg[:, 0::2, 1::2, :]
    x3 = xg[:, 1::2, 1::2, :]
    xm = jnp.concatenate([x0, x1, x2, x3], -1).reshape(B, -1, 4 * C)
    mean = jnp.mean(xm, -1, keepdims=True)
    var = jnp.mean((xm - mean) ** 2, -1, keepdims=True)
    xn = (xm - mean) / jnp.sqrt(var + LN_EPS) * gamma + beta
    return jnp.einsum("bld,od->blo", xn, w)


if __name__ == "__main__":
    def _run_case(B, H, W, C, key):
        kx, kg, kb, kw = jax.random.split(key, 4)
        x = jax.random.normal(kx, (B, H * W, C), dtype=jnp.float32)
        gamma = 1.0 + 0.1 * jax.random.normal(kg, (4 * C,), dtype=jnp.float32)
        beta = 0.1 * jax.random.normal(kb, (4 * C,), dtype=jnp.float32)
        w = jax.random.normal(kw, (2 * C, 4 * C), dtype=jnp.float32) * (4 * C) ** -0.5
        out = jax.block_until_ready(patch_merging(x, gamma, beta, w, H=H, W=W))
        ref = _reference(x, gamma, beta, w, H, W)
        assert out.shape == (B, (H // 2) * (W // 2), 2 * C)
        err = float(jnp.max(jnp.abs(out - ref)))
        assert jnp.allclose(out, ref, atol=2e-4, rtol=2e-4), f"max abs err {err}"

    root = jax.random.PRNGKey(0)
    k1, k2 = jax.random.split(root)
    _run_case(2, 16, 16, 4, k1)    # module-example scale: dim=4, 16x16 tokens
    _run_case(2, 16, 16, 64, k2)   # lane-dense case (2C = 128 output lanes)
    print("KERNEL_OK")
</pallas_src>

<mosaic_0001>
module attributes {stable_mosaic.version = 11 : i64} {
  func.func @_patch_merge_kernel(%arg0: i32, %arg1: memref<8x2x8x8xf32, #tpu.memory_space<vmem>>, %arg2: memref<8x8xf32, #tpu.memory_space<vmem>>, %arg3: memref<8x8xf32, #tpu.memory_space<vmem>>, %arg4: memref<1x8xf32, #tpu.memory_space<vmem>>, %arg5: memref<1x8xf32, #tpu.memory_space<vmem>>, %arg6: memref<64x8xf32, #tpu.memory_space<vmem>>) attributes {dimension_semantics = [#tpu.dimension_semantics<parallel>], iteration_bounds = array<i64: 2>, scalar_prefetch = 0 : i64, scratch_operands = 0 : i64, tpu.core_type = #tpu.core_type<tc>, window_params = [{transform_indices = @transform_0, window_bounds = array<i64: 8, 2, 8, 8>}, {pipeline_mode = #tpu.pipeline_mode<synchronous>, transform_indices = @transform_1, window_bounds = array<i64: 8, 8>}, {pipeline_mode = #tpu.pipeline_mode<synchronous>, transform_indices = @transform_2, window_bounds = array<i64: 8, 8>}, {pipeline_mode = #tpu.pipeline_mode<synchronous>, transform_indices = @transform_3, window_bounds = array<i64: 1, 8>}, {pipeline_mode = #tpu.pipeline_mode<synchronous>, transform_indices = @transform_4, window_bounds = array<i64: 1, 8>}, {transform_indices = @transform_5, window_bounds = array<i64: 64, 8>}]} {
    %c0 = arith.constant 0 : index
    %c0_0 = arith.constant 0 : index
    %c0_1 = arith.constant 0 : index
    %c0_2 = arith.constant 0 : index
    %0 = vector.load %arg1[%c0, %c0_0, %c0_1, %c0_2] : memref<8x2x8x8xf32, #tpu.memory_space<vmem>>, vector<8x1x8x8xf32>
    %1 = vector.shape_cast %0 : vector<8x1x8x8xf32> to vector<8x8x8xf32>
    %2 = vector.shape_cast %1 : vector<8x8x8xf32> to vector<64x8xf32>
    %c0_3 = arith.constant 0 : index
    %c1 = arith.constant 1 : index
    %c0_4 = arith.constant 0 : index
    %c0_5 = arith.constant 0 : index
    %3 = vector.load %arg1[%c0_3, %c1, %c0_4, %c0_5] : memref<8x2x8x8xf32, #tpu.memory_space<vmem>>, vector<8x1x8x8xf32>
    %4 = vector.shape_cast %3 : vector<8x1x8x8xf32> to vector<8x8x8xf32>
    %5 = vector.shape_cast %4 : vector<8x8x8xf32> to vector<64x8xf32>
    %cst = arith.constant dense<0.000000e+00> : vector<64xf32>
    %6 = vector.multi_reduction <add>, %2, %cst [1] : vector<64x8xf32> to vector<64xf32>
    %7 = vector.shape_cast %6 : vector<64xf32> to vector<64x1xf32>
    %cst_6 = arith.constant dense<0.000000e+00> : vector<64xf32>
    %8 = vector.multi_reduction <add>, %5, %cst_6 [1] : vector<64x8xf32> to vector<64xf32>
    %9 = vector.shape_cast %8 : vector<64xf32> to vector<64x1xf32>
    %10 = arith.addf %7, %9 : vector<64x1xf32>
    %11 = arith.mulf %2, %2 : vector<64x8xf32>
    %cst_7 = arith.constant dense<0.000000e+00> : vector<64xf32>
    %12 = vector.multi_reduction <add>, %11, %cst_7 [1] : vector<64x8xf32> to vector<64xf32>
    %13 = vector.shape_cast %12 : vector<64xf32> to vector<64x1xf32>
    %14 = arith.mulf %5, %5 : vector<64x8xf32>
    %cst_8 = arith.constant dense<0.000000e+00> : vector<64xf32>
    %15 = vector.multi_reduction <add>, %14, %cst_8 [1] : vector<64x8xf32> to vector<64xf32>
    %16 = vector.shape_cast %15 : vector<64xf32> to vector<64x1xf32>
    %17 = arith.addf %13, %16 : vector<64x1xf32>
    %cst_9 = arith.constant 6.250000e-02 : f32
    %18 = vector.broadcast %cst_9 : f32 to vector<64x1xf32>
    %19 = arith.mulf %10, %18 : vector<64x1xf32>
    %cst_10 = arith.constant 6.250000e-02 : f32
    %20 = vector.broadcast %cst_10 : f32 to vector<64x1xf32>
    %21 = arith.mulf %17, %20 : vector<64x1xf32>
    %22 = arith.mulf %19, %19 : vector<64x1xf32>
    %23 = arith.subf %21, %22 : vector<64x1xf32>
    %cst_11 = arith.constant 0.000000e+00 : f32
    %24 = vector.broadcast %cst_11 : f32 to vector<64x1xf32>
    %25 = arith.maximumf %23, %24 : vector<64x1xf32>
    %cst_12 = arith.constant 9.99999974E-6 : f32
    %26 = vector.broadcast %cst_12 : f32 to vector<64x1xf32>
    %27 = arith.addf %25, %26 : vector<64x1xf32>
    %28 = math.rsqrt %27 : vector<64x1xf32>
    %c0_13 = arith.constant 0 : index
    %c0_14 = arith.constant 0 : index
    %29 = vector.load %arg2[%c0_13, %c0_14] : memref<8x8xf32, #tpu.memory_space<vmem>>, vector<8x8xf32>
    %cst_15 = arith.constant dense<0.000000e+00> : vector<64x8xf32>
    %30 = tpu.matmul %2, %29, %cst_15 {dimension_numbers = #tpu.dot_dimension_numbers<[1], [0], [0], [1], [0, 0, 1, 1], [], []>} : vector<64x8xf32>, vector<8x8xf32>, vector<64x8xf32> -> vector<64x8xf32>
    %c0_16 = arith.constant 0 : index
    %c0_17 = arith.constant 0 : index
    %31 = vector.load %arg3[%c0_16, %c0_17] : memref<8x8xf32, #tpu.memory_space<vmem>>, vector<8x8xf32>
    %cst_18 = arith.constant dense<0.000000e+00> : vector<64x8xf32>
    %32 = tpu.matmul %5, %31, %cst_18 {dimension_numbers = #tpu.dot_dimension_numbers<[1], [0], [0], [1], [0, 0, 1, 1], [], []>} : vector<64x8xf32>, vector<8x8xf32>, vector<64x8xf32> -> vector<64x8xf32>
    %33 = arith.addf %30, %32 : vector<64x8xf32>
    %c0_19 = arith.constant 0 : index
    %c0_20 = arith.constant 0 : index
    %34 = vector.load %arg4[%c0_19, %c0_20] : memref<1x8xf32, #tpu.memory_space<vmem>>, vector<1x8xf32>
    %35 = vector.broadcast %19 : vector<64x1xf32> to vector<64x8xf32>
    %36 = vector.broadcast %34 : vector<1x8xf32> to vector<64x8xf32>
    %37 = arith.mulf %35, %36 : vector<64x8xf32>
    %38 = arith.subf %33, %37 : vector<64x8xf32>
    %39 = vector.broadcast %28 : vector<64x1xf32> to vector<64x8xf32>
    %40 = arith.mulf %39, %38 : vector<64x8xf32>
    %c0_21 = arith.constant 0 : index
    %c0_22 = arith.constant 0 : index
    %41 = vector.load %arg5[%c0_21, %c0_22] : memref<1x8xf32, #tpu.memory_space<vmem>>, vector<1x8xf32>
    %42 = vector.broadcast %41 : vector<1x8xf32> to vector<64x8xf32>
    %43 = arith.addf %40, %42 : vector<64x8xf32>
    %c0_23 = arith.constant 0 : index
    %c0_24 = arith.constant 0 : index
    %44 = vector.load %arg6[%c0_23, %c0_24] : memref<64x8xf32, #tpu.memory_space<vmem>>, vector<64x8xf32>
    tpu.vector_store %arg6[%c0_23, %c0_24], %43 {strides = array<i32>} : memref<64x8xf32, #tpu.memory_space<vmem>>, vector<64x8xf32>,
    return
  }
  func.func @transform_0(%arg0: i32) -> (i32, i32, i32, i32) {
    %c0_i32 = arith.constant 0 : i32
    %c0_i32_0 = arith.constant 0 : i32
    %c0_i32_1 = arith.constant 0 : i32
    %c0_i32_2 = arith.constant 0 : i32
    return %arg0, %c0_i32, %c0_i32_0, %c0_i32_1 : i32, i32, i32, i32
  }
  func.func @transform_1(%arg0: i32) -> (i32, i32) {
    %c0_i32 = arith.constant 0 : i32
    %c0_i32_0 = arith.constant 0 : i32
    %c0_i32_1 = arith.constant 0 : i32
    return %c0_i32, %c0_i32_0 : i32, i32
  }
  func.func @transform_2(%arg0: i32) -> (i32, i32) {
    %c0_i32 = arith.constant 0 : i32
    %c0_i32_0 = arith.constant 0 : i32
    %c0_i32_1 = arith.constant 0 : i32
    return %c0_i32, %c0_i32_0 : i32, i32
  }
  func.func @transform_3(%arg0: i32) -> (i32, i32) {
    %c0_i32 = arith.constant 0 : i32
    %c0_i32_0 = arith.constant 0 : i32
    %c0_i32_1 = arith.constant 0 : i32
    return %c0_i32, %c0_i32_0 : i32, i32
  }
  func.func @transform_4(%arg0: i32) -> (i32, i32) {
    %c0_i32 = arith.constant 0 : i32
    %c0_i32_0 = arith.constant 0 : i32
    %c0_i32_1 = arith.constant 0 : i32
    return %c0_i32, %c0_i32_0 : i32, i32
  }
  func.func @transform_5(%arg0: i32) -> (i32, i32) {
    %c0_i32 = arith.constant 0 : i32
    %c0_i32_0 = arith.constant 0 : i32
    return %arg0, %c0_i32 : i32, i32
  }
}

</mosaic_0001>

<llo_original>
// kernel: patch_merging.1
$region0: #{patch_merging.1}
  #allocation0 [shape = 'u32[]', space=smem, size = 0x4, offset = 0x4, fixed_abs, tag = 'smem constant byte address 0x4 - core index']
  #allocation1 [shape = 'u32[144,128]{1,0:T(1,128)}', space=vmem, size = 0x12000, scoped, tag = 'internal scratch']
  %s0 = inlined_call_operand.vmem [shape: f32[16,2,8,8], index: 0, kind: input, shape index: {}]
  %s1 = inlined_call_operand.vmem [shape: f32[8,8], index: 1, kind: input, shape index: {}]
  %s2 = inlined_call_operand.vmem [shape: f32[8,8], index: 2, kind: input, shape index: {}]
  %s3 = inlined_call_operand.vmem [shape: f32[1,8], index: 3, kind: input, shape index: {}]
  %s4 = inlined_call_operand.vmem [shape: f32[1,8], index: 4, kind: input, shape index: {}]
  %s5 = inlined_call_operand.vmem [shape: f32[128,8], index: 5, kind: output, shape index: {}]
  %s6 = sld [smem:[#allocation0]]
  $region53: #{patch_merging.1} parent=0
    _
  %s8 = ssub.s32 1, %s6
  %s9 = scalar_select 0, %s8, %s6
  loop: start=0, step=1, limit=4
  $region2: #{patch_merging.1} parent=0 // loop_pre_header
    _
  $region3: #{patch_merging.1} parent=0 // loop_header
    %s11 = sphi 0, %s15
    %p12 = scmp.ge.s32.totalorder %s11, 4
    %s21 = sphi 0, %s23
    %s24 = sphi 0, %s21
    %s25 = sphi 0, %s24
    %s41 = sphi 0, %s25
    %s45 = sphi 0, %s45
    %s47 = sphi 0, %s45
    %s48 = sphi 0, %s47
    %s62 = sphi 0, %s48
    %s66 = sphi 0, %s66
    %s68 = sphi 0, %s66
    %s69 = sphi 0, %s68
    %s83 = sphi 0, %s69
    %s87 = sphi 0, %s87
    %s89 = sphi 0, %s87
    %s90 = sphi 0, %s89
    %s104 = sphi 0, %s90
    %s108 = sphi 0, %s108
    %s110 = sphi 0, %s108
    %s111 = sphi 0, %s110
    %s125 = sphi 0, %s111
    %s131 = sphi 0, %s133
    %s134 = sphi 0, %s131
    %s135 = sphi 0, %s134
    %s151 = sphi 0, %s135
  $region4: #{patch_merging.1} parent=0 // loop_header_branch
    %14 = sbr.rel (%p12) target = $region8
  $region5: #{patch_merging.1} parent=0 // loop_body
    %s16 = ssub.s32 %s11, 1
    %s17 = ssub.s32 %s11, 2
    %s18 = sadd.s32 %s11, 1
    %s19 = ssub.s32 %s11, %s18
    %p20 = scmp.eq.s32.totalorder %s19, 0
    %s22 = sadd.s32 %s21, 1
    %s23 = scalar_select %p20, %s21, %s22
    %p26 = pneg %p20
    %p27 = scmp.eq.s32.totalorder %s11, 1
    %p28 = por %p26, %p27
    %p29 = scmp.ne.s32.totalorder %s21, %s24
    %p30 = scmp.eq.s32.totalorder %s11, 0
    %p31 = por %p29, %p30
    %p32 = scmp.ne.s32.totalorder %s21, %s24
    %p33 = scmp.eq.s32.totalorder %s16, 1
    %p34 = por %p32, %p33
    %p35 = scmp.ne.s32.totalorder %s24, %s25
    %p36 = scmp.eq.s32.totalorder %s16, 0
    %p37 = por %p35, %p36
    %p38 = scmp.ne.s32.totalorder %s24, %s25
    %p39 = scmp.eq.s32.totalorder %s17, 1
    %p40 = por %p38, %p39
    %p42 = scmp.ne.s32.totalorder %s25, %s41
    %p43 = scmp.eq.s32.totalorder %s17, 0
    %p44 = por %p42, %p43
    %s46 = sadd.s32 %s45, 1
    %p49 = scmp.eq.s32.totalorder %s11, 1
    %p50 = scmp.ne.s32.totalorder %s45, %s47
    %p51 = scmp.eq.s32.totalorder %s11, 0
    %p52 = por %p50, %p51
    %p53 = scmp.ne.s32.totalorder %s45, %s47
    %p54 = scmp.eq.s32.totalorder %s16, 1
    %p55 = por %p53, %p54
    %p56 = scmp.ne.s32.totalorder %s47, %s48
    %p57 = scmp.eq.s32.totalorder %s16, 0
    %p58 = por %p56, %p57
    %p59 = scmp.ne.s32.totalorder %s47, %s48
    %p60 = scmp.eq.s32.totalorder %s17, 1
    %p61 = por %p59, %p60
    %p63 = scmp.ne.s32.totalorder %s48, %s62
    %p64 = scmp.eq.s32.totalorder %s17, 0
    %p65 = por %p63, %p64
    %s67 = sadd.s32 %s66, 1
    %p70 = scmp.eq.s32.totalorder %s11, 1
    %p71 = scmp.ne.s32.totalorder %s66, %s68
    %p72 = scmp.eq.s32.totalorder %s11, 0
    %p73 = por %p71, %p72
    %p74 = scmp.ne.s32.totalorder %s66, %s68
    %p75 = scmp.eq.s32.totalorder %s16, 1
    %p76 = por %p74, %p75
    %p77 = scmp.ne.s32.totalorder %s68, %s69
    %p78 = scmp.eq.s32.totalorder %s16, 0
    %p79 = por %p77, %p78
    %p80 = scmp.ne.s32.totalorder %s68, %s69
    %p81 = scmp.eq.s32.totalorder %s17, 1
    %p82 = por %p80, %p81
    %p84 = scmp.ne.s32.totalorder %s69, %s83
    %p85 = scmp.eq.s32.totalorder %s17, 0
    %p86 = por %p84, %p85
    %s88 = sadd.s32 %s87, 1
    %p91 = scmp.eq.s32.totalorder %s11, 1
    %p92 = scmp.ne.s32.totalorder %s87, %s89
    %p93 = scmp.eq.s32.totalorder %s11, 0
    %p94 = por %p92, %p93
    %p95 = scmp.ne.s32.totalorder %s87, %s89
    %p96 = scmp.eq.s32.totalorder %s16, 1
    %p97 = por %p95, %p96
    %p98 = scmp.ne.s32.totalorder %s89, %s90
    %p99 = scmp.eq.s32.totalorder %s16, 0
    %p100 = por %p98, %p99
    %p101 = scmp.ne.s32.totalorder %s89, %s90
    %p102 = scmp.eq.s32.totalorder %s17, 1
    %p103 = por %p101, %p102
    %p105 = scmp.ne.s32.totalorder %s90, %s104
    %p106 = scmp.eq.s32.totalorder %s17, 0
    %p107 = por %p105, %p106
    %s109 = sadd.s32 %s108, 1
    %p112 = scmp.eq.s32.totalorder %s11, 1
    %p113 = scmp.ne.s32.totalorder %s108, %s110
    %p114 = scmp.eq.s32.totalorder %s11, 0
    %p115 = por %p113, %p114
    %p116 = scmp.ne.s32.totalorder %s108, %s110
    %p117 = scmp.eq.s32.totalorder %s16, 1
    %p118 = por %p116, %p117
    %p119 = scmp.ne.s32.totalorder %s110, %s111
    %p120 = scmp.eq.s32.totalorder %s16, 0
    %p121 = por %p119, %p120
    %p122 = scmp.ne.s32.totalorder %s110, %s111
    %p123 = scmp.eq.s32.totalorder %s17, 1
    %p124 = por %p122, %p123
    %p126 = scmp.ne.s32.totalorder %s111, %s125
    %p127 = scmp.eq.s32.totalorder %s17, 0
    %p128 = por %p126, %p127
    %s129 = ssub.s32 %s11, %s18
    %p130 = scmp.eq.s32.totalorder %s129, 0
    %s132 = sadd.s32 %s131, 1
    %s133 = scalar_select %p130, %s131, %s132
    %p136 = pneg %p130
    %p137 = scmp.eq.s32.totalorder %s11, 1
    %p138 = por %p136, %p137
    %p139 = scmp.ne.s32.totalorder %s131, %s134
    %p140 = scmp.eq.s32.totalorder %s11, 0
    %p141 = por %p139, %p140
    %p142 = scmp.ne.s32.totalorder %s131, %s134
    %p143 = scmp.eq.s32.totalorder %s16, 1
    %p144 = por %p142, %p143
    %p145 = scmp.ne.s32.totalorder %s134, %s135
    %p146 = scmp.eq.s32.totalorder %s16, 0
    %p147 = por %p145, %p146
    %p148 = scmp.ne.s32.totalorder %s134, %s135
    %p149 = scmp.eq.s32.totalorder %s17, 1
    %p150 = por %p148, %p149
    %p152 = scmp.ne.s32.totalorder %s135, %s151
    %p153 = scmp.eq.s32.totalorder %s17, 0
    %p154 = por %p152, %p153
    %p155 = scmp.le.s32.totalorder 1, %s11
    %p156 = scmp.lt.s32.totalorder %s11, 3
    %p157 = pnand %p155, %p156
    %p158 = pneg %p157
    // Predicated region
    $region9: #{patch_merging.1} parent=5 // pred_check
      _
    $region10: #{patch_merging.1} parent=5 // pred_check_branch
      %160 = sbr.rel (%p157) target = $region12
    $region11: #{patch_merging.1} parent=5 // pred_region
      %s161 = ssub.s32 %s11, 1
      // Predicated region
      $region13: #{patch_merging.1} parent=11 // pred_check
        %p162 = pneg %p58
      $region14: #{patch_merging.1} parent=11 // pred_check_branch
        %164 = sbr.rel (%p162) target = $region16
      $region15: #{patch_merging.1} parent=11 // pred_region
        _
      $region16: #{patch_merging.1} parent=11 // pred_fallthru
        _
      // Predicated region
      $region17: #{patch_merging.1} parent=11 // pred_check
        %p165 = pneg %p79
      $region18: #{patch_merging.1} parent=11 // pred_check_branch
        %167 = sbr.rel (%p165) target = $region20
      $region19: #{patch_merging.1} parent=11 // pred_region
        _
      $region20: #{patch_merging.1} parent=11 // pred_fallthru
        _
      // Predicated region
      $region21: #{patch_merging.1} parent=11 // pred_check
        %p168 = pneg %p100
      $region22: #{patch_merging.1} parent=11 // pred_check_branch
        %170 = sbr.rel (%p168) target = $region24
      $region23: #{patch_merging.1} parent=11 // pred_region
        _
      $region24: #{patch_merging.1} parent=11 // pred_fallthru
        _
      // Predicated region
      $region25: #{patch_merging.1} parent=11 // pred_check
        %p171 = pneg %p121
      $region26: #{patch_merging.1} parent=11 // pred_check_branch
        %173 = sbr.rel (%p171) target = $region28
      $region27: #{patch_merging.1} parent=11 // pred_region
        _
      $region28: #{patch_merging.1} parent=11 // pred_fallthru
        _
    $region12: #{patch_merging.1} parent=5 // pred_fallthru
      _
    %p174 = scmp.lt.s32.totalorder %s11, 2
    // Predicated region
    $region29: #{patch_merging.1} parent=5 // pred_check
      %p175 = pneg %p174
    $region30: #{patch_merging.1} parent=5 // pred_check_branch
      %177 = sbr.rel (%p175) target = $region32
    $region31: #{patch_merging.1} parent=5 // pred_region
      // Predicated region
      $region33: #{patch_merging.1} parent=31 // pred_check
        %p178 = pneg %p31
      $region34: #{patch_merging.1} parent=31 // pred_check_branch
        %180 = sbr.rel (%p178) target = $region36
      $region35: #{patch_merging.1} parent=31 // pred_region
        %s181 = smul.u32 8, %s11
        %p182 = scmp.lt.s32.totalorder %s181, 15
        %s183 = scalar_select %p182, %s181, 15
        %s184 = smul.addr %s183, 2
        %s185 = smul.addr %s184, 8
        %s186 = scalar_lea.vmem %s0, %s185
        %s187 = smul.u32 8, %s11
      $region36: #{patch_merging.1} parent=31 // pred_fallthru
        _
    $region32: #{patch_merging.1} parent=5 // pred_fallthru
      _
    %p188 = scmp.le.s32.totalorder 1, %s11
    %p189 = scmp.lt.s32.totalorder %s11, 3
    %p190 = pnand %p188, %p189
    %p191 = pneg %p190
    // Predicated region
    $region37: #{patch_merging.1} parent=5 // pred_check
      _
    $region38: #{patch_merging.1} parent=5 // pred_check_branch
      %193 = sbr.rel (%p190) target = $region40
    $region39: #{patch_merging.1} parent=5 // pred_region
      %s194 = ssub.s32 %s11, 1
      %s195 = smul.u32 8, %s16
      %p196 = scmp.lt.s32.totalorder %s195, 15
      %s197 = scalar_select %p196, %s195, 15
      %s198 = smul.addr %s197, 2
      %s199 = smul.addr %s198, 8
      %s200 = scalar_lea.vmem %s0, %s199
      %p201 = pneg %p37
      %p202 = pneg %p34
      %p203 = pneg %p58
      %p204 = pneg %p55
      %p205 = pneg %p79
      %p206 = pneg %p76
      %p207 = pneg %p100
      %p208 = pneg %p97
      %p209 = pneg %p121
      %p210 = pneg %p118
      %p211 = pneg %p147
      %p212 = pneg %p144
      %s213 = smul.u32 8, %s16
      %p214 = scmp.lt.s32.totalorder %s213, 15
      %s215 = scalar_select %p214, %s213, 15
      %s216 = smul.addr %s215, 8
      %s217 = scalar_lea.vmem %s5, %s216
      %s218 = smul.u32 8, %s16
      %p219 = scmp.lt.s32.totalorder %s218, 15
      %s220 = scalar_select %p219, %s218, 15
      %s221 = smul.addr %s220, 2
      %s222 = smul.addr %s221, 8
      %s223 = scalar_lea.vmem %s0, %s222
      %s224 = smul.u32 8, %s16
      %s225 = smul.u32 8, %s16
      %p226 = scmp.lt.s32.totalorder %s225, 15
      %s227 = scalar_select %p226, %s225, 15
      %s228 = smul.addr %s227, 8
      %s229 = scalar_lea.vmem %s5, %s228
      %s230 = smul.u32 8, %s16
      %v231 = vld [vmem:[%s223] sm:$0xff]
      %v232 = vld [vmem:[%s223 + $0x10] sm:$0xff]
      %v233 = vld [vmem:[%s223 + $0x20] sm:$0xff]
      %v234 = vld [vmem:[%s223 + $0x30] sm:$0xff]
      %v235 = vld [vmem:[%s223 + $0x40] sm:$0xff]
      %v236 = vld [vmem:[%s223 + $0x50] sm:$0xff]
      %v237 = vld [vmem:[%s223 + $0x60] sm:$0xff]
      %v238 = vld [vmem:[%s223 + $0x70] sm:$0xff]
      %s239 = scalar_lea.vmem %s223, 8
      %v240 = vld [vmem:[%s239] sm:$0xff]
      %v241 = vld [vmem:[%s239 + $0x10] sm:$0xff]
      %v242 = vld [vmem:[%s239 + $0x20] sm:$0xff]
      %v243 = vld [vmem:[%s239 + $0x30] sm:$0xff]
      %v244 = vld [vmem:[%s239 + $0x40] sm:$0xff]
      %v245 = vld [vmem:[%s239 + $0x50] sm:$0xff]
      %v246 = vld [vmem:[%s239 + $0x60] sm:$0xff]
      %v247 = vld [vmem:[%s239 + $0x70] sm:$0xff]
      %vm248 = vcmask 64512
      %v249 = vsel %vm248, %v231, 0.0
      %250 = vadd.xlane.f32.xlu0 %v249
      %v251 = vpop.xlane.xlu0 %250
      %v252 = vsel %vm248, %v232, 0.0
      %253 = vadd.xlane.f32.xlu0 %v252
      %v254 = vpop.xlane.xlu0 %253
      %v255 = vsel %vm248, %v233, 0.0
      %256 = vadd.xlane.f32.xlu0 %v255
      %v257 = vpop.xlane.xlu0 %256
      %v258 = vsel %vm248, %v234, 0.0
      %259 = vadd.xlane.f32.xlu0 %v258
      %v260 = vpop.xlane.xlu0 %259
      %v261 = vsel %vm248, %v235, 0.0
      %262 = vadd.xlane.f32.xlu0 %v261
      %v263 = vpop.xlane.xlu0 %262
      %v264 = vsel %vm248, %v236, 0.0
      %265 = vadd.xlane.f32.xlu0 %v264
      %v266 = vpop.xlane.xlu0 %265
      %v267 = vsel %vm248, %v237, 0.0
      %268 = vadd.xlane.f32.xlu0 %v267
      %v269 = vpop.xlane.xlu0 %268
      %v270 = vsel %vm248, %v238, 0.0
      %271 = vadd.xlane.f32.xlu0 %v270
      %v272 = vpop.xlane.xlu0 %271
      %v273 = vsel %vm248, %v240, 0.0
      %274 = vadd.xlane.f32.xlu0 %v273
      %v275 = vpop.xlane.xlu0 %274
      %v276 = vsel %vm248, %v241, 0.0
      %277 = vadd.xlane.f32.xlu0 %v276
      %v278 = vpop.xlane.xlu0 %277
      %v279 = vsel %vm248, %v242, 0.0
      %280 = vadd.xlane.f32.xlu0 %v279
      %v281 = vpop.xlane.xlu0 %280
      %v282 = vsel %vm248, %v243, 0.0
      %283 = vadd.xlane.f32.xlu0 %v282
      %v284 = vpop.xlane.xlu0 %283
      %v285 = vsel %vm248, %v244, 0.0
      %286 = vadd.xlane.f32.xlu0 %v285
      %v287 = vpop.xlane.xlu0 %286
      %v288 = vsel %vm248, %v245, 0.0
      %289 = vadd.xlane.f32.xlu0 %v288
      %v290 = vpop.xlane.xlu0 %289
      %v291 = vsel %vm248, %v246, 0.0
      %292 = vadd.xlane.f32.xlu0 %v291
      %v293 = vpop.xlane.xlu0 %292
      %v294 = vsel %vm248, %v247, 0.0
      %295 = vadd.xlane.f32.xlu0 %v294
      %v296 = vpop.xlane.xlu0 %295
      %v297 = vadd.f32 %v251, %v275
      %v298 = vadd.f32 %v254, %v278
      %v299 = vadd.f32 %v257, %v281
      %v300 = vadd.f32 %v260, %v284
      %v301 = vadd.f32 %v263, %v287
      %v302 = vadd.f32 %v266, %v290
      %v303 = vadd.f32 %v269, %v293
      %v304 = vadd.f32 %v272, %v296
      %v305 = vmul.f32 %v231, %v231
      %v306 = vmul.f32 %v232, %v232
      %v307 = vmul.f32 %v233, %v233
      %v308 = vmul.f32 %v234, %v234
      %v309 = vmul.f32 %v235, %v235
      %v310 = vmul.f32 %v236, %v236
      %v311 = vmul.f32 %v237, %v237
      %v312 = vmul.f32 %v238, %v238
      %v313 = vsel %vm248, %v305, 0.0
      %314 = vadd.xlane.f32.xlu0 %v313
      %v315 = vpop.xlane.xlu0 %314
      %v316 = vsel %vm248, %v306, 0.0
      %317 = vadd.xlane.f32.xlu0 %v316
      %v318 = vpop.xlane.xlu0 %317
      %v319 = vsel %vm248, %v307, 0.0
      %320 = vadd.xlane.f32.xlu0 %v319
      %v321 = vpop.xlane.xlu0 %320
      %v322 = vsel %vm248, %v308, 0.0
      %323 = vadd.xlane.f32.xlu0 %v322
      %v324 = vpop.xlane.xlu0 %323
      %v325 = vsel %vm248, %v309, 0.0
      %326 = vadd.xlane.f32.xlu0 %v325
      %v327 = vpop.xlane.xlu0 %326
      %v328 = vsel %vm248, %v310, 0.0
      %329 = vadd.xlane.f32.xlu0 %v328
      %v330 = vpop.xlane.xlu0 %329
      %v331 = vsel %vm248, %v311, 0.0
      %332 = vadd.xlane.f32.xlu0 %v331
      %v333 = vpop.xlane.xlu0 %332
      %v334 = vsel %vm248, %v312, 0.0
      %335 = vadd.xlane.f32.xlu0 %v334
      %v336 = vpop.xlane.xlu0 %335
      %v337 = vmul.f32 %v240, %v240
      %v338 = vmul.f32 %v241, %v241
      %v339 = vmul.f32 %v242, %v242
      %v340 = vmul.f32 %v243, %v243
      %v341 = vmul.f32 %v244, %v244
      %v342 = vmul.f32 %v245, %v245
      %v343 = vmul.f32 %v246, %v246
      %v344 = vmul.f32 %v247, %v247
      %v345 = vsel %vm248, %v337, 0.0
      %346 = vadd.xlane.f32.xlu0 %v345
      %v347 = vpop.xlane.xlu0 %346
      %v348 = vsel %vm248, %v338, 0.0
      %349 = vadd.xlane.f32.xlu0 %v348
      %v350 = vpop.xlane.xlu0 %349
      %v351 = vsel %vm248, %v339, 0.0
      %352 = vadd.xlane.f32.xlu0 %v351
      %v353 = vpop.xlane.xlu0 %352
      %v354 = vsel %vm248, %v340, 0.0
      %355 = vadd.xlane.f32.xlu0 %v354
      %v356 = vpop.xlane.xlu0 %355
      %v357 = vsel %vm248, %v341, 0.0
      %358 = vadd.xlane.f32.xlu0 %v357
      %v359 = vpop.xlane.xlu0 %358
      %v360 = vsel %vm248, %v342, 0.0
      %361 = vadd.xlane.f32.xlu0 %v360
      %v362 = vpop.xlane.xlu0 %361
      %v363 = vsel %vm248, %v343, 0.0
      %364 = vadd.xlane.f32.xlu0 %v363
      %v365 = vpop.xlane.xlu0 %364
      %v366 = vsel %vm248, %v344, 0.0
      %367 = vadd.xlane.f32.xlu0 %v366
      %v368 = vpop.xlane.xlu0 %367
      %v369 = vadd.f32 %v315, %v347
      %v370 = vadd.f32 %v318, %v350
      %v371 = vadd.f32 %v321, %v353
      %v372 = vadd.f32 %v324, %v356
      %v373 = vadd.f32 %v327, %v359
      %v374 = vadd.f32 %v330, %v362
      %v375 = vadd.f32 %v333, %v365
      %v376 = vadd.f32 %v336, %v368
      %v377 = vmul.f32 %v297, 0.0625
      %v378 = vmul.f32 %v298, 0.0625
      %v379 = vmul.f32 %v299, 0.0625
      %v380 = vmul.f32 %v300, 0.0625
      %v381 = vmul.f32 %v301, 0.0625
      %v382 = vmul.f32 %v302, 0.0625
      %v383 = vmul.f32 %v303, 0.0625
      %v384 = vmul.f32 %v304, 0.0625
      %v385 = vmul.f32 %v369, 0.0625
      %v386 = vmul.f32 %v370, 0.0625
      %v387 = vmul.f32 %v371, 0.0625
      %v388 = vmul.f32 %v372, 0.0625
      %v389 = vmul.f32 %v373, 0.0625
      %v390 = vmul.f32 %v374, 0.0625
      %v391 = vmul.f32 %v375, 0.0625
      %v392 = vmul.f32 %v376, 0.0625
      %v393 = vmul.f32 %v377, %v377
      %v394 = vmul.f32 %v378, %v378
      %v395 = vmul.f32 %v379, %v379
      %v396 = vmul.f32 %v380, %v380
      %v397 = vmul.f32 %v381, %v381
      %v398 = vmul.f32 %v382, %v382
      %v399 = vmul.f32 %v383, %v383
      %v400 = vmul.f32 %v384, %v384
      %v401 = vsub.f32 %v385, %v393
      %v402 = vsub.f32 %v386, %v394
      %v403 = vsub.f32 %v387, %v395
      %v404 = vsub.f32 %v388, %v396
      %v405 = vsub.f32 %v389, %v397
      %v406 = vsub.f32 %v390, %v398
      %v407 = vsub.f32 %v391, %v399
      %v408 = vsub.f32 %v392, %v400
      %v409 = vmax.f32 %v401, 0.0
      %v410 = vmax.f32 %v402, 0.0
      %v411 = vmax.f32 %v403, 0.0
      %v412 = vmax.f32 %v404, 0.0
      %v413 = vmax.f32 %v405, 0.0
      %v414 = vmax.f32 %v406, 0.0
      %v415 = vmax.f32 %v407, 0.0
      %v416 = vmax.f32 %v408, 0.0
      %v417 = vadd.f32 %v409, 1e-05
      %v418 = vadd.f32 %v410, 1e-05
      %v419 = vadd.f32 %v411, 1e-05
      %v420 = vadd.f32 %v412, 1e-05
      %v421 = vadd.f32 %v413, 1e-05
      %v422 = vadd.f32 %v414, 1e-05
      %v423 = vadd.f32 %v415, 1e-05
      %v424 = vadd.f32 %v416, 1e-05
      %v425 = vrsqrt.pop %v417
      %v426 = vrsqrt.pop %v418
      %v427 = vrsqrt.pop %v419
      %v428 = vrsqrt.pop %v420
      %v429 = vrsqrt.pop %v421
      %v430 = vrsqrt.pop %v422
      %v431 = vrsqrt.pop %v423
      %v432 = vrsqrt.pop %v424
      %v433 = vld [vmem:[%s1] sm:$0xff]
      %v434 = vld [vmem:[%s2] sm:$0xff]
      %v436 = vsel %vm248, %v240, 0
      %v439 = vsel %vm248, %v241, 0
      %v442 = vsel %vm248, %v242, 0
      %v445 = vsel %vm248, %v243, 0
      %v448 = vsel %vm248, %v244, 0
      %v451 = vsel %vm248, %v245, 0
      %v454 = vsel %vm248, %v246, 0
      %v457 = vsel %vm248, %v247, 0
      %459 = vmatprep.subr.mxu0 0.0
      %460 = vmatpush1.msra.mxu0 0.0
      %461 = vmatprep.subr.mxu0 0.0
      %462 = vmatpush1.msra.mxu0 0.0
      %463 = vmatprep.subr.mxu0 0.0
      %464 = vmatpush1.msra.mxu0 0.0
      %465 = vmatprep.subr.mxu0 0.0
      %466 = vmatpush1.msra.mxu0 0.0
      %467 = vmatprep.subr.mxu0 0.0
      %468 = vmatpush1.msra.mxu0 0.0
      %469 = vmatprep.subr.mxu0 0.0
      %470 = vmatpush1.msra.mxu0 0.0
      %471 = vmatprep.subr.mxu0 0.0
      %472 = vmatpush1.msra.mxu0 0.0
      %473 = vmatprep.subr.mxu0 0.0
      %474 = vmatpush1.msra.mxu0 0.0
      %475 = vmatprep.subr.mxu0 0.0
      %476 = vmatpush1.msra.mxu0 0.0
      %477 = vmatprep.subr.mxu0 0.0
      %478 = vmatpush1.msra.mxu0 0.0
      %479 = vmatprep.subr.mxu0 0.0
      %480 = vmatpush1.msra.mxu0 0.0
      %481 = vmatprep.subr.mxu0 0.0
      %482 = vmatpush1.msra.mxu0 0.0
      %483 = vmatprep.subr.mxu0 0.0
      %484 = vmatpush1.msra.mxu0 0.0
      %485 = vmatprep.subr.mxu0 0.0
      %486 = vmatpush1.msra.mxu0 0.0
      %487 = vmatprep.subr.mxu0 0.0
      %488 = vmatpush1.msra.mxu0 0.0
      %489 = vmatprep.subr.mxu0 0.0
      %490 = vmatpush1.msra.mxu0 %v434
      %491 = vmatprep.subr.mxu0 0.0
      %492 = vmatpush2.msra.mxu0 0.0
      %493 = vmatprep.subr.mxu0 0.0
      %494 = vmatpush2.msra.mxu0 0.0
      %495 = vmatprep.subr.mxu0 0.0
      %496 = vmatpush2.msra.mxu0 0.0
      %497 = vmatprep.subr.mxu0 0.0
      %498 = vmatpush2.msra.mxu0 0.0
      %499 = vmatprep.subr.mxu0 0.0
      %500 = vmatpush2.msra.mxu0 0.0
      %501 = vmatprep.subr.mxu0 0.0
      %502 = vmatpush2.msra.mxu0 0.0
      %503 = vmatprep.subr.mxu0 0.0
      %504 = vmatpush2.msra.mxu0 0.0
      %505 = vmatprep.subr.mxu0 0.0
      %506 = vmatpush2.msra.mxu0 0.0
      %507 = vmatprep.subr.mxu0 0.0
      %508 = vmatpush2.msra.mxu0 0.0
      %509 = vmatprep.subr.mxu0 0.0
      %510 = vmatpush2.msra.mxu0 0.0
      %511 = vmatprep.subr.mxu0 0.0
      %512 = vmatpush2.msra.mxu0 0.0
      %513 = vmatprep.subr.mxu0 0.0
      %514 = vmatpush2.msra.mxu0 0.0
      %515 = vmatprep.subr.mxu0 0.0
      %516 = vmatpush2.msra.mxu0 0.0
      %517 = vmatprep.subr.mxu0 0.0
      %518 = vmatpush2.msra.mxu0 0.0
      %519 = vmatprep.subr.mxu0 0.0
      %520 = vmatpush2.msra.mxu0 0.0
      %521 = vmatprep.subr.mxu0 0.0
      %522 = vmatpush2.msra.mxu0 0.0
      %523 = vmatprep.mubr.f32.mxu0 0.0
      %524 = vmatmul.mubr.f32.gmra.mxu0 %v436
      %v525 = vpop.f32.mrf.mxu0
      %v526 = vadd.f32 0.0, %v525
      %v527 = vpop.f32.mrf.mxu0
      %528 = vmatprep.mubr.f32.mxu0 0.0
      %529 = vmatmul.mubr.f32.gmra.mxu0 %v439
      %v530 = vpop.f32.mrf.mxu0
      %v531 = vadd.f32 0.0, %v530
      %v532 = vpop.f32.mrf.mxu0
      %533 = vmatprep.mubr.f32.mxu0 0.0
      %534 = vmatmul.mubr.f32.gmra.mxu0 %v442
      %v535 = vpop.f32.mrf.mxu0
      %v536 = vadd.f32 0.0, %v535
      %v537 = vpop.f32.mrf.mxu0
      %538 = vmatprep.mubr.f32.mxu0 0.0
      %539 = vmatmul.mubr.f32.gmra.mxu0 %v445
      %v540 = vpop.f32.mrf.mxu0
      %v541 = vadd.f32 0.0, %v540
      %v542 = vpop.f32.mrf.mxu0
      %543 = vmatprep.mubr.f32.mxu0 0.0
      %544 = vmatmul.mubr.f32.gmra.mxu0 %v448
      %v545 = vpop.f32.mrf.mxu0
      %v546 = vadd.f32 0.0, %v545
      %v547 = vpop.f32.mrf.mxu0
      %548 = vmatprep.mubr.f32.mxu0 0.0
      %549 = vmatmul.mubr.f32.gmra.mxu0 %v451
      %v550 = vpop.f32.mrf.mxu0
      %v551 = vadd.f32 0.0, %v550
      %v552 = vpop.f32.mrf.mxu0
      %553 = vmatprep.mubr.f32.mxu0 0.0
      %554 = vmatmul.mubr.f32.gmra.mxu0 %v454
      %v555 = vpop.f32.mrf.mxu0
      %v556 = vadd.f32 0.0, %v555
      %v557 = vpop.f32.mrf.mxu0
      %558 = vmatprep.mubr.f32.mxu0 0.0
      %559 = vmatmul.mubr.f32.gmra.mxu0 %v457
      %v560 = vpop.f32.mrf.mxu0
      %v561 = vadd.f32 0.0, %v560
      %v562 = vpop.f32.mrf.mxu0
      %563 = vdwg.mxu0
      %v565 = vsel %vm248, %v231, 0
      %v568 = vsel %vm248, %v232, 0
      %v571 = vsel %vm248, %v233, 0
      %v574 = vsel %vm248, %v234, 0
      %v577 = vsel %vm248, %v235, 0
      %v580 = vsel %vm248, %v236, 0
      %v583 = vsel %vm248, %v237, 0
      %v586 = vsel %vm248, %v238, 0
      %588 = vmatprep.subr.mxu0 0.0
      %589 = vmatpush1.msra.mxu0 0.0
      %590 = vmatprep.subr.mxu0 0.0
      %591 = vmatpush1.msra.mxu0 0.0
      %592 = vmatprep.subr.mxu0 0.0
      %593 = vmatpush1.msra.mxu0 0.0
      %594 = vmatprep.subr.mxu0 0.0
      %595 = vmatpush1.msra.mxu0 0.0
      %596 = vmatprep.subr.mxu0 0.0
      %597 = vmatpush1.msra.mxu0 0.0
      %598 = vmatprep.subr.mxu0 0.0
      %599 = vmatpush1.msra.mxu0 0.0
      %600 = vmatprep.subr.mxu0 0.0
      %601 = vmatpush1.msra.mxu0 0.0
      %602 = vmatprep.subr.mxu0 0.0
      %603 = vmatpush1.msra.mxu0 0.0
      %604 = vmatprep.subr.mxu0 0.0
      %605 = vmatpush1.msra.mxu0 0.0
      %606 = vmatprep.subr.mxu0 0.0
      %607 = vmatpush1.msra.mxu0 0.0
      %608 = vmatprep.subr.mxu0 0.0
      %609 = vmatpush1.msra.mxu0 0.0
      %610 = vmatprep.subr.mxu0 0.0
      %611 = vmatpush1.msra.mxu0 0.0
      %612 = vmatprep.subr.mxu0 0.0
      %613 = vmatpush1.msra.mxu0 0.0
      %614 = vmatprep.subr.mxu0 0.0
      %615 = vmatpush1.msra.mxu0 0.0
      %616 = vmatprep.subr.mxu0 0.0
      %617 = vmatpush1.msra.mxu0 0.0
      %618 = vmatprep.subr.mxu0 0.0
      %619 = vmatpush1.msra.mxu0 %v433
      %620 = vmatprep.subr.mxu0 0.0
      %621 = vmatpush2.msra.mxu0 0.0
      %622 = vmatprep.subr.mxu0 0.0
      %623 = vmatpush2.msra.mxu0 0.0
      %624 = vmatprep.subr.mxu0 0.0
      %625 = vmatpush2.msra.mxu0 0.0
      %626 = vmatprep.subr.mxu0 0.0
      %627 = vmatpush2.msra.mxu0 0.0
      %628 = vmatprep.subr.mxu0 0.0
      %629 = vmatpush2.msra.mxu0 0.0
      %630 = vmatprep.subr.mxu0 0.0
      %631 = vmatpush2.msra.mxu0 0.0
      %632 = vmatprep.subr.mxu0 0.0
      %633 = vmatpush2.msra.mxu0 0.0
      %634 = vmatprep.subr.mxu0 0.0
      %635 = vmatpush2.msra.mxu0 0.0
      %636 = vmatprep.subr.mxu0 0.0
      %637 = vmatpush2.msra.mxu0 0.0
      %638 = vmatprep.subr.mxu0 0.0
      %639 = vmatpush2.msra.mxu0 0.0
      %640 = vmatprep.subr.mxu0 0.0
      %641 = vmatpush2.msra.mxu0 0.0
      %642 = vmatprep.subr.mxu0 0.0
      %643 = vmatpush2.msra.mxu0 0.0
      %644 = vmatprep.subr.mxu0 0.0
      %645 = vmatpush2.msra.mxu0 0.0
      %646 = vmatprep.subr.mxu0 0.0
      %647 = vmatpush2.msra.mxu0 0.0
      %648 = vmatprep.subr.mxu0 0.0
      %649 = vmatpush2.msra.mxu0 0.0
      %650 = vmatprep.subr.mxu0 0.0
      %651 = vmatpush2.msra.mxu0 0.0
      %652 = vmatprep.mubr.f32.mxu0 0.0
      %653 = vmatmul.mubr.f32.gmra.mxu0 %v565
      %v654 = vpop.f32.mrf.mxu0
      %v655 = vadd.f32 %v526, %v654
      %v656 = vpop.f32.mrf.mxu0
      %657 = vmatprep.mubr.f32.mxu0 0.0
      %658 = vmatmul.mubr.f32.gmra.mxu0 %v568
      %v659 = vpop.f32.mrf.mxu0
      %v660 = vadd.f32 %v531, %v659
      %v661 = vpop.f32.mrf.mxu0
      %662 = vmatprep.mubr.f32.mxu0 0.0
      %663 = vmatmul.mubr.f32.gmra.mxu0 %v571
      %v664 = vpop.f32.mrf.mxu0
      %v665 = vadd.f32 %v536, %v664
      %v666 = vpop.f32.mrf.mxu0
      %667 = vmatprep.mubr.f32.mxu0 0.0
      %668 = vmatmul.mubr.f32.gmra.mxu0 %v574
      %v669 = vpop.f32.mrf.mxu0
      %v670 = vadd.f32 %v541, %v669
      %v671 = vpop.f32.mrf.mxu0
      %672 = vmatprep.mubr.f32.mxu0 0.0
      %673 = vmatmul.mubr.f32.gmra.mxu0 %v577
      %v674 = vpop.f32.mrf.mxu0
      %v675 = vadd.f32 %v546, %v674
      %v676 = vpop.f32.mrf.mxu0
      %677 = vmatprep.mubr.f32.mxu0 0.0
      %678 = vmatmul.mubr.f32.gmra.mxu0 %v580
      %v679 = vpop.f32.mrf.mxu0
      %v680 = vadd.f32 %v551, %v679
      %v681 = vpop.f32.mrf.mxu0
      %682 = vmatprep.mubr.f32.mxu0 0.0
      %683 = vmatmul.mubr.f32.gmra.mxu0 %v583
      %v684 = vpop.f32.mrf.mxu0
      %v685 = vadd.f32 %v556, %v684
      %v686 = vpop.f32.mrf.mxu0
      %687 = vmatprep.mubr.f32.mxu0 0.0
      %688 = vmatmul.mubr.f32.gmra.mxu0 %v586
      %v689 = vpop.f32.mrf.mxu0
      %v690 = vadd.f32 %v561, %v689
      %v691 = vpop.f32.mrf.mxu0
      %692 = vdwg.mxu0
      %v693 = vld [vmem:[%s3] sm:$0x1]
      %v695 = vlaneseq
      %v696 = vshrl.u32 %v695, 7
      %v697 = vsub.s32 0, %v696
      %v698 = vrot.slane %v693, %v697
      %v700 = vmul.f32 %v377, %v698
      %v701 = vmul.f32 %v378, %v698
      %v702 = vmul.f32 %v379, %v698
      %v703 = vmul.f32 %v380, %v698
      %v704 = vmul.f32 %v381, %v698
      %v705 = vmul.f32 %v382, %v698
      %v706 = vmul.f32 %v383, %v698
      %v707 = vmul.f32 %v384, %v698
      %v708 = vsub.f32 %v655, %v700
      %v709 = vsub.f32 %v660, %v701
      %v710 = vsub.f32 %v665, %v702
      %v711 = vsub.f32 %v670, %v703
      %v712 = vsub.f32 %v675, %v704
      %v713 = vsub.f32 %v680, %v705
      %v714 = vsub.f32 %v685, %v706
      %v715 = vsub.f32 %v690, %v707
      %v716 = vmul.f32 %v425, %v708
      %v717 = vmul.f32 %v426, %v709
      %v718 = vmul.f32 %v427, %v710
      %v719 = vmul.f32 %v428, %v711
      %v720 = vmul.f32 %v429, %v712
      %v721 = vmul.f32 %v430, %v713
      %v722 = vmul.f32 %v431, %v714
      %v723 = vmul.f32 %v432, %v715
      %v724 = vld [vmem:[%s4] sm:$0x1]
      %v726 = vlaneseq
      %v727 = vshrl.u32 %v726, 7
      %v728 = vsub.s32 0, %v727
      %v729 = vrot.slane %v724, %v728
      %v731 = vadd.f32 %v716, %v729
      %v732 = vadd.f32 %v717, %v729
      %v733 = vadd.f32 %v718, %v729
      %v734 = vadd.f32 %v719, %v729
      %v735 = vadd.f32 %v720, %v729
      %v736 = vadd.f32 %v721, %v729
      %v737 = vadd.f32 %v722, %v729
      %v738 = vadd.f32 %v723, %v729
      %739 = vst.msk [vmem:[%s229] sm:$0xff] %vm248, %v731
      %740 = vst.msk [vmem:[%s229 + $0x8] sm:$0xff] %vm248, %v732
      %741 = vst.msk [vmem:[%s229 + $0x10] sm:$0xff] %vm248, %v733
      %742 = vst.msk [vmem:[%s229 + $0x18] sm:$0xff] %vm248, %v734
      %743 = vst.msk [vmem:[%s229 + $0x20] sm:$0xff] %vm248, %v735
      %744 = vst.msk [vmem:[%s229 + $0x28] sm:$0xff] %vm248, %v736
      %745 = vst.msk [vmem:[%s229 + $0x30] sm:$0xff] %vm248, %v737
      %746 = vst.msk [vmem:[%s229 + $0x38] sm:$0xff] %vm248, %v738
      %s747 = smul.u32 8, %s16
      %p748 = scmp.lt.s32.totalorder %s747, 15
      %s749 = scalar_select %p748, %s747, 15
      %s750 = smul.addr %s749, 8
      %s751 = scalar_lea.vmem %s5, %s750
      // Predicated region
      $region41: #{patch_merging.1} parent=39 // pred_check
        %p752 = pneg %p144
      $region42: #{patch_merging.1} parent=39 // pred_check_branch
        %754 = sbr.rel (%p752) target = $region44
      $region43: #{patch_merging.1} parent=39 // pred_region
        %s755 = smul.u32 8, %s16
      $region44: #{patch_merging.1} parent=39 // pred_fallthru
        _
    $region40: #{patch_merging.1} parent=5 // pred_fallthru
      _
    %p756 = scmp.le.s32.totalorder 2, %s11
    // Predicated region
    $region45: #{patch_merging.1} parent=5 // pred_check
      %p757 = pneg %p756
    $region46: #{patch_merging.1} parent=5 // pred_check_branch
      %759 = sbr.rel (%p757) target = $region48
    $region47: #{patch_merging.1} parent=5 // pred_region
      %s760 = ssub.s32 %s11, 2
      // Predicated region
      $region49: #{patch_merging.1} parent=47 // pred_check
        %p761 = pneg %p150
      $region50: #{patch_merging.1} parent=47 // pred_check_branch
        %763 = sbr.rel (%p761) target = $region52
      $region51: #{patch_merging.1} parent=47 // pred_region
        %s764 = smul.u32 8, %s17
        %p765 = scmp.lt.s32.totalorder %s764, 15
        %s766 = scalar_select %p765, %s764, 15
        %s767 = smul.addr %s766, 8
        %s768 = scalar_lea.vmem %s5, %s767
      $region52: #{patch_merging.1} parent=47 // pred_fallthru
        _
    $region48: #{patch_merging.1} parent=5 // pred_fallthru
      _
  $region6: #{patch_merging.1} parent=0 // loop_footer
    %s15 = sadd.s32 1, %s11
  $region7: #{patch_merging.1} parent=0 // loop_footer_branch
    %10 = sbr.rel target = $region3
  $region8: #{patch_merging.1} parent=0 // loop_exit
    _

</llo_original>
